<compile_context>
chip_gen: v7x
topology: tpu7x:2x2x1
jax: 0.10.0
libtpu: 0.0.40
codegen_flags: <defaults>
</compile_context>

<pallas_src>
import math

import jax
import jax.numpy as jnp
from jax.experimental import pallas as pl
from jax.experimental.pallas import tpu as pltpu

NEGATIVE_SLOPE = 0.01


def _round_up(a, m):
    return -(-a // m) * m


def _physical_vmem_bytes():
    """Best-effort query of per-core VMEM; fall back to the v7x minimum."""
    try:
        return int(pltpu.get_tpu_info().vmem_capacity_bytes)
    except Exception:
        return 64 * 1024 * 1024


def _vmem_budgets():
    phys = _physical_vmem_bytes()
    request_cap = max(32 << 20, phys - (16 << 20))   # what we ask Mosaic for
    tile_budget = request_cap - (8 << 20)            # what our refs may occupy
    return request_cap, tile_budget


def _resident_spec(block_shape, index_map):
    """BlockSpec for a grid-invariant input: single VMEM buffer, never re-fetched."""
    if hasattr(pl, "Buffered"):
        try:
            return pl.BlockSpec(block_shape, index_map,
                                pipeline_mode=pl.Buffered(1))
        except TypeError:
            pass
    return pl.BlockSpec(block_shape, index_map)


def _pick_batch_tile(B, batch_block, tile_budget, weight_bytes, row_bytes):
    """Rows per grid step: multiple of 8, fits the VMEM budget, >=2 blocks when possible."""
    bp8 = _round_up(B, 8)
    tb_cap = max(8, ((tile_budget - weight_bytes) // row_bytes) // 8 * 8)
    tb = max(8, (min(batch_block, tb_cap, bp8) // 8) * 8)
    # v7x has two TensorCores per chip: make sure the ("parallel",) batch axis
    # has at least two blocks whenever the (padded) batch allows it.
    if bp8 >= 16 and tb >= bp8:
        tb = max(8, ((bp8 // 2) // 8) * 8)
    return tb


# --------------------------------------------------------------------------
# Path A: lane-packed (N < 128).  Lanes are [E0 px0 py0 pz0 E1 px1 ...].
# --------------------------------------------------------------------------

def _lane_packed_kernel(m1_ref, m2_ref, bc_ref, bias_ref, x_ref, o_ref):
    """Blocks: m1/m2/bc (4N, 4N), bias (1, 4N), x/o (TB, 4N).

    m1/m2 = kron(W^T, I4) act directly on the interleaved layout; bc is a 0/1
    pattern so (hb @ bc)[:, 4o+f] == hb[:, 4o], i.e. it broadcasts the biased
    E lane of every 4-lane group to all four lanes of that group.
    """
    wdt = m1_ref.dtype
    h = jnp.dot(x_ref[...].astype(wdt), m1_ref[...],
                preferred_element_type=jnp.float32)            # linear1
    hb = h + bias_ref[...]                                     # bias on E lanes only
    e_b = jnp.dot(hb, bc_ref[...],
                  preferred_element_type=jnp.float32)          # E broadcast (idle MXU)
    scale = jnp.where(e_b > 0.0, 1.0, NEGATIVE_SLOPE)
    act = hb * scale                                           # FourVecLeakyReLUE
    y = jnp.dot(act.astype(wdt), m2_ref[...],
                preferred_element_type=jnp.float32)            # linear2
    # residual: re-read x_ref here instead of holding x live across both matmuls
    o_ref[...] = (y + x_ref[...].astype(jnp.float32)).astype(o_ref.dtype)


def _lane_packed_block(x, w1, w2, bias, batch_block, weight_dtype):
    B, N, _ = x.shape
    K = 4 * N

    # (B, N, 4) -> (B, 4N): contiguous flatten -- NO transpose / HBM relayout.
    x2 = x.reshape(B, K).astype(jnp.float32)

    # One-time weight expansion (in a real network this is done at init):
    #   h[b, 4o+g] = sum_i x2[b, 4i+g] * W[o, i]  ==  (x2 @ kron(W^T, I4))[b, 4o+g]
    eye4 = jnp.eye(4, dtype=jnp.float32)
    m1 = jnp.kron(jnp.transpose(w1).astype(jnp.float32), eye4).astype(weight_dtype)
    m2 = jnp.kron(jnp.transpose(w2).astype(jnp.float32), eye4).astype(weight_dtype)
    # 0/1 pattern for the per-group E broadcast.
    b0 = jnp.zeros((4, 4), jnp.float32).at[0, :].set(1.0)
    bc = jnp.kron(jnp.eye(N, dtype=jnp.float32), b0)
    # bias placed on the E lane of every group, zeros on the p lanes.
    bias_flat = jnp.kron(jnp.reshape(bias, (1, N)).astype(jnp.float32),
                         jnp.array([[1.0, 0.0, 0.0, 0.0]], jnp.float32))

    lanes = _round_up(K, 128)
    wrows = _round_up(K, 8)
    wbytes = (2 * wrows * lanes * jnp.dtype(weight_dtype).itemsize   # m1, m2 (single-buffered)
              + wrows * lanes * 4                                    # bc (f32)
              + 8 * lanes * 4)                                       # bias
    row_bytes = 16 * lanes            # x + out slabs, f32, double-buffered
    request_cap, tile_budget = _vmem_budgets()
    tb = _pick_batch_tile(B, batch_block, tile_budget, wbytes, row_bytes)

    bp = _round_up(B, tb)
    if bp != B:
        x2 = jnp.pad(x2, ((0, bp - B), (0, 0)))
    vmem_limit = int(min(request_cap,
                         max(wbytes + tb * row_bytes + (8 << 20), 16 << 20)))

    out = pl.pallas_call(
        _lane_packed_kernel,
        out_shape=jax.ShapeDtypeStruct((bp, K), x.dtype),
        grid_spec=pltpu.PrefetchScalarGridSpec(
            num_scalar_prefetch=0,
            grid=(bp // tb,),
            in_specs=[
                _resident_spec((K, K), lambda i: (0, 0)),   # kron(W1^T, I4)
                _resident_spec((K, K), lambda i: (0, 0)),   # kron(W2^T, I4)
                _resident_spec((K, K), lambda i: (0, 0)),   # E-broadcast pattern
                _resident_spec((1, K), lambda i: (0, 0)),   # bias on E lanes
                pl.BlockSpec((tb, K), lambda i: (i, 0)),    # x rows
            ],
            out_specs=pl.BlockSpec((tb, K), lambda i: (i, 0)),
        ),
        compiler_params=pltpu.CompilerParams(
            dimension_semantics=("parallel",),   # batch blocks shard across TCs (v7x)
            vmem_limit_bytes=vmem_limit,
        ),
    )(m1, m2, bc, bias_flat, x2)

    # (bp, 4N) -> (B, N, 4): row slice + contiguous reshape (no transpose).
    return out[:B].reshape(B, N, 4)


# --------------------------------------------------------------------------
# Path B: component-major (N >= 128).  Slab layout (4, B, N), lanes = features.
# --------------------------------------------------------------------------

def _component_major_kernel(w1t_ref, w2t_ref, bias_ref, x_ref, o_ref):
    """Blocks: w1t/w2t (N, N), bias (1, N), x/o (4, TB, N)."""
    f4, tb, n = x_ref.shape
    wdt = w1t_ref.dtype
    h = jnp.dot(x_ref[...].astype(wdt).reshape(f4 * tb, n), w1t_ref[...],
                preferred_element_type=jnp.float32).reshape(f4, tb, n)
    e = h[0] + bias_ref[...]                               # bias on the E rows only
    scale = jnp.where(e > 0.0, 1.0, NEGATIVE_SLOPE)        # (TB, N)
    act = jnp.concatenate([(e * scale)[None], h[1:] * scale[None]], axis=0)
    y = jnp.dot(act.reshape(f4 * tb, n).astype(wdt), w2t_ref[...],
                preferred_element_type=jnp.float32)
    # residual: re-read x_ref instead of holding it live across both matmuls
    o_ref[...] = (y.reshape(f4, tb, n)
                  + x_ref[...].astype(jnp.float32)).astype(o_ref.dtype)


def _component_major_block(x, w1, w2, bias, batch_block, weight_dtype):
    B, N, _ = x.shape
    # TODO(synk): in a multi-block network, carry activations in this
    # component-major (4, B, N) layout between residual blocks so these two
    # HBM transposes are paid once per network, not once per block.
    xt = jnp.transpose(x, (2, 0, 1)).astype(jnp.float32)          # (4, B, N)
    w1t = jnp.transpose(w1).astype(weight_dtype)                  # (N_in, N_out)
    w2t = jnp.transpose(w2).astype(weight_dtype)
    bias_row = jnp.reshape(bias, (1, N)).astype(jnp.float32)

    lanes = _round_up(N, 128)
    wrows = _round_up(N, 8)
    wbytes = (2 * wrows * lanes * jnp.dtype(weight_dtype).itemsize
              + 8 * lanes * 4)
    row_bytes = 64 * lanes            # (4, tb, N) in + out slabs, f32, double-buffered
    request_cap, tile_budget = _vmem_budgets()
    # TODO(synk): for N large enough that single-buffered weights no longer fit
    # the budget (f32 N >~ 3k on v7x), add a K-tiled reduction grid axis instead.
    tb = _pick_batch_tile(B, batch_block, tile_budget, wbytes, row_bytes)

    bp = _round_up(B, tb)
    if bp != B:
        xt = jnp.pad(xt, ((0, 0), (0, bp - B), (0, 0)))
    vmem_limit = int(min(request_cap,
                         max(wbytes + tb * row_bytes + (8 << 20), 16 << 20)))

    out = pl.pallas_call(
        _component_major_kernel,
        out_shape=jax.ShapeDtypeStruct((4, bp, N), x.dtype),
        grid_spec=pltpu.PrefetchScalarGridSpec(
            num_scalar_prefetch=0,
            grid=(bp // tb,),
            in_specs=[
                _resident_spec((N, N), lambda i: (0, 0)),       # W1^T
                _resident_spec((N, N), lambda i: (0, 0)),       # W2^T
                _resident_spec((1, N), lambda i: (0, 0)),       # bias
                pl.BlockSpec((4, tb, N), lambda i: (0, i, 0)),  # x slab
            ],
            out_specs=pl.BlockSpec((4, tb, N), lambda i: (0, i, 0)),
        ),
        compiler_params=pltpu.CompilerParams(
            dimension_semantics=("parallel",),
            vmem_limit_bytes=vmem_limit,
        ),
    )(w1t, w2t, bias_row, xt)

    return jnp.transpose(out[:, :B, :], (1, 2, 0))


# --------------------------------------------------------------------------
# Public entry point
# --------------------------------------------------------------------------

def fourvec_residual_block(x, w1, w2, bias, *, batch_block=512,
                           weight_dtype=jnp.float32):
    """FourVecLinearResidualBlock forward.

    x: (B, N, 4) with last dim [E, px, py, pz]; w1, w2: (N, N) [out, in];
    bias: (N,), (N, 1) or (1, N, 1).
    weight_dtype=jnp.bfloat16 runs both matmuls on the native bf16 MXU with
    f32 accumulation (recommended on v6e/v7x when ~1e-2 tolerance is OK).
    """
    B, N, F = x.shape
    assert F == 4, "last dim must be the 4-vector [E, px, py, pz]"
    if N < 128:
        return _lane_packed_block(x, w1, w2, bias, batch_block, weight_dtype)
    return _component_major_block(x, w1, w2, bias, batch_block, weight_dtype)


# --------------------------------------------------------------------------
# Pure-JAX reference and tests
# --------------------------------------------------------------------------

def reference(x, w1, w2, bias):
    b = jnp.reshape(bias, (1, -1, 1))
    out = jnp.einsum("oi,bif->bof", w1, x)
    e = out[..., 0:1] + b
    p = out[..., 1:]
    e_leaky = jnp.where(e > 0, e, NEGATIVE_SLOPE * e)
    p_scaled = jnp.where(e > 0, p, NEGATIVE_SLOPE * p)
    act = jnp.concatenate([e_leaky, p_scaled], axis=-1)
    out2 = jnp.einsum("oi,bif->bof", w2, act)
    return out2 + x


def _run_case(key, B, N, batch_block=512, weight_dtype=jnp.float32, tol=1e-5):
    kx, k1, k2 = jax.random.split(key, 3)
    x = jax.random.normal(kx, (B, N, 4), dtype=jnp.float32)
    # kaiming_uniform_(a=sqrt(5)) on (N, N) -> uniform(-1/sqrt(N), 1/sqrt(N))
    bound = 1.0 / math.sqrt(N)
    w1 = jax.random.uniform(k1, (N, N), jnp.float32, minval=-bound, maxval=bound)
    w2 = jax.random.uniform(k2, (N, N), jnp.float32, minval=-bound, maxval=bound)
    # the PyTorch module calls uniform_(bias, bound, bound) -> constant bound
    bias = jnp.full((N,), bound, dtype=jnp.float32)

    if jnp.dtype(weight_dtype) == jnp.dtype(jnp.bfloat16):
        # Pre-round the matmul operands so the reference sees the same values
        # the bf16 MXU path consumes (keeps the E>0 sign test & allclose stable).
        x = x.astype(jnp.bfloat16).astype(jnp.float32)
        w1 = w1.astype(jnp.bfloat16).astype(jnp.float32)
        w2 = w2.astype(jnp.bfloat16).astype(jnp.float32)

    out = fourvec_residual_block(x, w1, w2, bias, batch_block=batch_block,
                                 weight_dtype=weight_dtype)
    out = jax.block_until_ready(out)
    ref = reference(x, w1, w2, bias)
    assert out.shape == (B, N, 4)
    assert jnp.allclose(out, ref, atol=tol, rtol=tol), (
        B, N, str(jnp.dtype(weight_dtype)),
        float(jnp.max(jnp.abs(out - ref))))


if __name__ == "__main__":
    key = jax.random.PRNGKey(0)
    k1, k2, k3, k4 = jax.random.split(key, 4)

    # lane-packed path: 4*N = 128 lanes, single batch block (module's small config)
    _run_case(k1, B=2, N=32)
    # lane-packed path with >= 2 batch blocks ("parallel" axis feeds both v7x TCs)
    _run_case(k2, B=16, N=32)
    # component-major path (N >= 128), 2 batch blocks
    _run_case(k3, B=16, N=128, tol=1e-4)
    # bf16 weights / matmul operands (native v6e/v7x MXU), f32 accumulation
    _run_case(k4, B=16, N=32, weight_dtype=jnp.bfloat16, tol=2e-2)

    print("KERNEL_OK")
</pallas_src>

<mosaic_0001>
module attributes {stable_mosaic.version = 11 : i64} {
  func.func @_lane_packed_kernel(%arg0: i32, %arg1: memref<128x128xf32, #tpu.memory_space<vmem>>, %arg2: memref<128x128xf32, #tpu.memory_space<vmem>>, %arg3: memref<128x128xf32, #tpu.memory_space<vmem>>, %arg4: memref<1x128xf32, #tpu.memory_space<vmem>>, %arg5: memref<8x128xf32, #tpu.memory_space<vmem>>, %arg6: memref<8x128xf32, #tpu.memory_space<vmem>>) attributes {dimension_semantics = [#tpu.dimension_semantics<parallel>], iteration_bounds = array<i64: 1>, scalar_prefetch = 0 : i64, scratch_operands = 0 : i64, tpu.core_type = #tpu.core_type<tc>, window_params = [{pipeline_mode = #tpu.pipeline_mode<synchronous>, transform_indices = @transform_0, window_bounds = array<i64: 128, 128>}, {pipeline_mode = #tpu.pipeline_mode<synchronous>, transform_indices = @transform_1, window_bounds = array<i64: 128, 128>}, {pipeline_mode = #tpu.pipeline_mode<synchronous>, transform_indices = @transform_2, window_bounds = array<i64: 128, 128>}, {pipeline_mode = #tpu.pipeline_mode<synchronous>, transform_indices = @transform_3, window_bounds = array<i64: 1, 128>}, {transform_indices = @transform_4, window_bounds = array<i64: 8, 128>}, {transform_indices = @transform_5, window_bounds = array<i64: 8, 128>}]} {
    %c0 = arith.constant 0 : index
    %c0_0 = arith.constant 0 : index
    %0 = vector.load %arg5[%c0, %c0_0] : memref<8x128xf32, #tpu.memory_space<vmem>>, vector<8x128xf32>
    %c0_1 = arith.constant 0 : index
    %c0_2 = arith.constant 0 : index
    %1 = vector.load %arg1[%c0_1, %c0_2] : memref<128x128xf32, #tpu.memory_space<vmem>>, vector<128x128xf32>
    %cst = arith.constant dense<0.000000e+00> : vector<8x128xf32>
    %2 = tpu.matmul %0, %1, %cst {dimension_numbers = #tpu.dot_dimension_numbers<[1], [0], [0], [1], [0, 0, 1, 1], [], []>} : vector<8x128xf32>, vector<128x128xf32>, vector<8x128xf32> -> vector<8x128xf32>
    %c0_3 = arith.constant 0 : index
    %c0_4 = arith.constant 0 : index
    %3 = vector.load %arg4[%c0_3, %c0_4] : memref<1x128xf32, #tpu.memory_space<vmem>>, vector<1x128xf32>
    %4 = vector.broadcast %3 : vector<1x128xf32> to vector<8x128xf32>
    %5 = arith.addf %2, %4 : vector<8x128xf32>
    %c0_5 = arith.constant 0 : index
    %c0_6 = arith.constant 0 : index
    %6 = vector.load %arg3[%c0_5, %c0_6] : memref<128x128xf32, #tpu.memory_space<vmem>>, vector<128x128xf32>
    %cst_7 = arith.constant dense<0.000000e+00> : vector<8x128xf32>
    %7 = tpu.matmul %5, %6, %cst_7 {dimension_numbers = #tpu.dot_dimension_numbers<[1], [0], [0], [1], [0, 0, 1, 1], [], []>} : vector<8x128xf32>, vector<128x128xf32>, vector<8x128xf32> -> vector<8x128xf32>
    %cst_8 = arith.constant 0.000000e+00 : f32
    %8 = vector.broadcast %cst_8 : f32 to vector<8x128xf32>
    %9 = arith.cmpf ogt, %7, %8 : vector<8x128xf32>
    %cst_9 = arith.constant 1.000000e+00 : f32
    %cst_10 = arith.constant 0.00999999977 : f32
    %10 = vector.broadcast %cst_9 : f32 to vector<8x128xf32>
    %11 = vector.broadcast %cst_10 : f32 to vector<8x128xf32>
    %12 = arith.select %9, %10, %11 : vector<8x128xi1>, vector<8x128xf32>
    %13 = arith.mulf %5, %12 : vector<8x128xf32>
    %c0_11 = arith.constant 0 : index
    %c0_12 = arith.constant 0 : index
    %14 = vector.load %arg2[%c0_11, %c0_12] : memref<128x128xf32, #tpu.memory_space<vmem>>, vector<128x128xf32>
    %cst_13 = arith.constant dense<0.000000e+00> : vector<8x128xf32>
    %15 = tpu.matmul %13, %14, %cst_13 {dimension_numbers = #tpu.dot_dimension_numbers<[1], [0], [0], [1], [0, 0, 1, 1], [], []>} : vector<8x128xf32>, vector<128x128xf32>, vector<8x128xf32> -> vector<8x128xf32>
    %c0_14 = arith.constant 0 : index
    %c0_15 = arith.constant 0 : index
    %16 = vector.load %arg5[%c0_14, %c0_15] : memref<8x128xf32, #tpu.memory_space<vmem>>, vector<8x128xf32>
    %17 = arith.addf %15, %16 : vector<8x128xf32>
    %c0_16 = arith.constant 0 : index
    %c0_17 = arith.constant 0 : index
    %18 = vector.load %arg6[%c0_16, %c0_17] : memref<8x128xf32, #tpu.memory_space<vmem>>, vector<8x128xf32>
    tpu.vector_store %arg6[%c0_16, %c0_17], %17 {strides = array<i32>} : memref<8x128xf32, #tpu.memory_space<vmem>>, vector<8x128xf32>,
    return
  }
  func.func @transform_0(%arg0: i32) -> (i32, i32) {
    %c0_i32 = arith.constant 0 : i32
    %c0_i32_0 = arith.constant 0 : i32
    %c0_i32_1 = arith.constant 0 : i32
    return %c0_i32, %c0_i32_0 : i32, i32
  }
  func.func @transform_1(%arg0: i32) -> (i32, i32) {
    %c0_i32 = arith.constant 0 : i32
    %c0_i32_0 = arith.constant 0 : i32
    %c0_i32_1 = arith.constant 0 : i32
    return %c0_i32, %c0_i32_0 : i32, i32
  }
  func.func @transform_2(%arg0: i32) -> (i32, i32) {
    %c0_i32 = arith.constant 0 : i32
    %c0_i32_0 = arith.constant 0 : i32
    %c0_i32_1 = arith.constant 0 : i32
    return %c0_i32, %c0_i32_0 : i32, i32
  }
  func.func @transform_3(%arg0: i32) -> (i32, i32) {
    %c0_i32 = arith.constant 0 : i32
    %c0_i32_0 = arith.constant 0 : i32
    %c0_i32_1 = arith.constant 0 : i32
    return %c0_i32, %c0_i32_0 : i32, i32
  }
  func.func @transform_4(%arg0: i32) -> (i32, i32) {
    %c0_i32 = arith.constant 0 : i32
    %c0_i32_0 = arith.constant 0 : i32
    return %arg0, %c0_i32 : i32, i32
  }
  func.func @transform_5(%arg0: i32) -> (i32, i32) {
    %c0_i32 = arith.constant 0 : i32
    %c0_i32_0 = arith.constant 0 : i32
    return %arg0, %c0_i32 : i32, i32
  }
}

</mosaic_0001>

<llo_original>
// kernel: tpu_custom_call.1
$region0: #{tpu_custom_call.1}
  #allocation0 [shape = 'u32[]', space=smem, size = 0x4, offset = 0x4, fixed_abs, tag = 'smem constant byte address 0x4 - core index']
  #allocation1 [shape = 'u32[144,128]{1,0:T(1,128)}', space=vmem, size = 0x12000, scoped, tag = 'internal scratch']
  %s0 = inlined_call_operand.hbm [shape: f32[128,128], index: 0, kind: input, shape index: {}]
  %s1 = inlined_call_operand.hbm [shape: f32[128,128], index: 1, kind: input, shape index: {}]
  %s2 = inlined_call_operand.hbm [shape: f32[128,128], index: 2, kind: input, shape index: {}]
  %s3 = inlined_call_operand.vmem [shape: f32[1,128], index: 3, kind: input, shape index: {}]
  %s4 = inlined_call_operand.vmem [shape: f32[8,128], index: 4, kind: input, shape index: {}]
  %s5 = inlined_call_operand.hbm [shape: f32[8,128], index: 5, kind: output, shape index: {}]
  %s6 = sld [smem:[#allocation0]]
  $region42: #{tpu_custom_call.1} parent=0
    _
  %s8 = ssub.s32 1, %s6
  %s9 = scalar_select 0, %s8, %s6
  $region1: #{tpu_custom_call.1} parent=0
    #allocation2 [shape = 'u8[65536]{0}', space=vmem, size = 0x10000, scoped, tag = 'input window, operand 0, single buffered']
    #allocation3 [shape = 's32[1]{0}', space=sflag, size = 0x4, scoped, tag = 'scoped memory for tpu_custom_call.1']
    #allocation4 [shape = 's32[1]{0}', space=sflag, size = 0x4, scoped, tag = 'scoped memory for tpu_custom_call.1']
    #allocation5 [shape = 'u8[65536]{0}', space=vmem, size = 0x10000, scoped, tag = 'input window, operand 1, single buffered']
    #allocation6 [shape = 's32[1]{0}', space=sflag, size = 0x4, scoped, tag = 'scoped memory for tpu_custom_call.1']
    #allocation7 [shape = 'u8[65536]{0}', space=vmem, size = 0x10000, scoped, tag = 'input window, operand 2, single buffered']
    #allocation8 [shape = 'u8[4096]{0}', space=vmem, size = 0x1000, scoped, tag = 'output window, operand 0, single buffered']
    %10 = vsyncpa [#allocation3], 0
    %11 = vsyncpa [#allocation6], 0
    %12 = vsyncpa [#allocation4], 0
    // Predicated region
    $region2: #{tpu_custom_call.1} parent=1 // pred_check
      _
    $region3: #{tpu_custom_call.1} parent=1 // pred_check_branch
      %14 = sbr.rel (0) target = $region5
    $region4: #{tpu_custom_call.1} parent=1 // pred_region
      %s16 = ssub.s32 2048, 2048
      %17 = vsyncadd [#allocation3], %s16
      %s18 = sshll.u32 [#allocation2], 4
      %s19 = int_to_ptr.vmem [resolvable:$true] %s18
      %24 = dma.hbm_to_vmem [thread:$0]  %s0, 2048, %s19, [#allocation3], 128, 128, 8
    $region5: #{tpu_custom_call.1} parent=1 // pred_fallthru
      _
    // Predicated region
    $region6: #{tpu_custom_call.1} parent=1 // pred_check
      _
    $region7: #{tpu_custom_call.1} parent=1 // pred_check_branch
      %26 = sbr.rel (0) target = $region9
    $region8: #{tpu_custom_call.1} parent=1 // pred_region
      %s28 = ssub.s32 2048, 2048
      %29 = vsyncadd [#allocation6], %s28
      %s30 = sshll.u32 [#allocation5], 4
      %s31 = int_to_ptr.vmem [resolvable:$true] %s30
      %36 = dma.hbm_to_vmem [thread:$0]  %s1, 2048, %s31, [#allocation6], 128, 128, 8
    $region9: #{tpu_custom_call.1} parent=1 // pred_fallthru
      _
    // Predicated region
    $region10: #{tpu_custom_call.1} parent=1 // pred_check
      _
    $region11: #{tpu_custom_call.1} parent=1 // pred_check_branch
      %38 = sbr.rel (0) target = $region13
    $region12: #{tpu_custom_call.1} parent=1 // pred_region
      %s40 = ssub.s32 2048, 2048
      %41 = vsyncadd [#allocation6], %s40
      %s42 = sshll.u32 [#allocation7], 4
      %s43 = int_to_ptr.vmem [resolvable:$true] %s42
      %48 = dma.hbm_to_vmem [thread:$0]  %s2, 2048, %s43, [#allocation6], 128, 128, 8
    $region13: #{tpu_custom_call.1} parent=1 // pred_fallthru
      _
    // Predicated region
    $region14: #{tpu_custom_call.1} parent=1 // pred_check
      _
    $region15: #{tpu_custom_call.1} parent=1 // pred_check_branch
      %50 = sbr.rel (0) target = $region17
    $region16: #{tpu_custom_call.1} parent=1 // pred_region
      _
    $region17: #{tpu_custom_call.1} parent=1 // pred_fallthru
      _
    // Predicated region
    $region18: #{tpu_custom_call.1} parent=1 // pred_check
      _
    $region19: #{tpu_custom_call.1} parent=1 // pred_check_branch
      %52 = sbr.rel (0) target = $region21
    $region20: #{tpu_custom_call.1} parent=1 // pred_region
      _
    $region21: #{tpu_custom_call.1} parent=1 // pred_fallthru
      _
    // Predicated region
    $region22: #{tpu_custom_call.1} parent=1 // pred_check
      _
    $region23: #{tpu_custom_call.1} parent=1 // pred_check_branch
      %54 = sbr.rel (0) target = $region25
    $region24: #{tpu_custom_call.1} parent=1 // pred_region
      %55 = dma.done [#allocation3], 2048
    $region25: #{tpu_custom_call.1} parent=1 // pred_fallthru
      _
    // Predicated region
    $region26: #{tpu_custom_call.1} parent=1 // pred_check
      _
    $region27: #{tpu_custom_call.1} parent=1 // pred_check_branch
      %57 = sbr.rel (0) target = $region29
    $region28: #{tpu_custom_call.1} parent=1 // pred_region
      %58 = dma.done [#allocation6], 2048
    $region29: #{tpu_custom_call.1} parent=1 // pred_fallthru
      _
    // Predicated region
    $region30: #{tpu_custom_call.1} parent=1 // pred_check
      _
    $region31: #{tpu_custom_call.1} parent=1 // pred_check_branch
      %60 = sbr.rel (0) target = $region33
    $region32: #{tpu_custom_call.1} parent=1 // pred_region
      %61 = dma.done [#allocation6], 2048
    $region33: #{tpu_custom_call.1} parent=1 // pred_fallthru
      _
    %v62 = vld [vmem:[%s4] sm:$0xff]
    %v63 = vld [vmem:[#allocation2] sm:$0xff]
    %v64 = vld [vmem:[#allocation2 + $0x8] sm:$0xff]
    %v65 = vld [vmem:[#allocation2 + $0x10] sm:$0xff]
    %v66 = vld [vmem:[#allocation2 + $0x18] sm:$0xff]
    %v67 = vld [vmem:[#allocation2 + $0x20] sm:$0xff]
    %v68 = vld [vmem:[#allocation2 + $0x28] sm:$0xff]
    %v69 = vld [vmem:[#allocation2 + $0x30] sm:$0xff]
    %v70 = vld [vmem:[#allocation2 + $0x38] sm:$0xff]
    %v71 = vld [vmem:[#allocation2 + $0x40] sm:$0xff]
    %v72 = vld [vmem:[#allocation2 + $0x48] sm:$0xff]
    %v73 = vld [vmem:[#allocation2 + $0x50] sm:$0xff]
    %v74 = vld [vmem:[#allocation2 + $0x58] sm:$0xff]
    %v75 = vld [vmem:[#allocation2 + $0x60] sm:$0xff]
    %v76 = vld [vmem:[#allocation2 + $0x68] sm:$0xff]
    %v77 = vld [vmem:[#allocation2 + $0x70] sm:$0xff]
    %v78 = vld [vmem:[#allocation2 + $0x78] sm:$0xff]
    %v79 = vld [vmem:[%s3] sm:$0x1]
    %v81 = vlaneseq
    %v82 = vshrl.u32 %v81, 7
    %v83 = vsub.s32 0, %v82
    %v84 = vrot.slane %v79, %v83
    %86 = vmatprep.subr.mxu0 0.0
    %87 = vmatpush1.msra.mxu0 %v63
    %88 = vmatprep.subr.mxu0 0.0
    %89 = vmatpush1.msra.mxu0 %v64
    %90 = vmatprep.subr.mxu0 0.0
    %91 = vmatpush1.msra.mxu0 %v65
    %92 = vmatprep.subr.mxu0 0.0
    %93 = vmatpush1.msra.mxu0 %v66
    %94 = vmatprep.subr.mxu0 0.0
    %95 = vmatpush1.msra.mxu0 %v67
    %96 = vmatprep.subr.mxu0 0.0
    %97 = vmatpush1.msra.mxu0 %v68
    %98 = vmatprep.subr.mxu0 0.0
    %99 = vmatpush1.msra.mxu0 %v69
    %100 = vmatprep.subr.mxu0 0.0
    %101 = vmatpush1.msra.mxu0 %v70
    %102 = vmatprep.subr.mxu0 0.0
    %103 = vmatpush1.msra.mxu0 %v71
    %104 = vmatprep.subr.mxu0 0.0
    %105 = vmatpush1.msra.mxu0 %v72
    %106 = vmatprep.subr.mxu0 0.0
    %107 = vmatpush1.msra.mxu0 %v73
    %108 = vmatprep.subr.mxu0 0.0
    %109 = vmatpush1.msra.mxu0 %v74
    %110 = vmatprep.subr.mxu0 0.0
    %111 = vmatpush1.msra.mxu0 %v75
    %112 = vmatprep.subr.mxu0 0.0
    %113 = vmatpush1.msra.mxu0 %v76
    %114 = vmatprep.subr.mxu0 0.0
    %115 = vmatpush1.msra.mxu0 %v77
    %116 = vmatprep.subr.mxu0 0.0
    %117 = vmatpush1.msra.mxu0 %v78
    %118 = vmatprep.subr.mxu0 0.0
    %119 = vmatpush1.msra.mxu0 0.0
    %120 = vmatprep.subr.mxu0 0.0
    %121 = vmatpush1.msra.mxu0 0.0
    %122 = vmatprep.subr.mxu0 0.0
    %123 = vmatpush1.msra.mxu0 0.0
    %124 = vmatprep.subr.mxu0 0.0
    %125 = vmatpush1.msra.mxu0 0.0
    %126 = vmatprep.subr.mxu0 0.0
    %127 = vmatpush1.msra.mxu0 0.0
    %128 = vmatprep.subr.mxu0 0.0
    %129 = vmatpush1.msra.mxu0 0.0
    %130 = vmatprep.subr.mxu0 0.0
    %131 = vmatpush1.msra.mxu0 0.0
    %132 = vmatprep.subr.mxu0 0.0
    %133 = vmatpush1.msra.mxu0 0.0
    %134 = vmatprep.subr.mxu0 0.0
    %135 = vmatpush1.msra.mxu0 0.0
    %136 = vmatprep.subr.mxu0 0.0
    %137 = vmatpush1.msra.mxu0 0.0
    %138 = vmatprep.subr.mxu0 0.0
    %139 = vmatpush1.msra.mxu0 0.0
    %140 = vmatprep.subr.mxu0 0.0
    %141 = vmatpush1.msra.mxu0 0.0
    %142 = vmatprep.subr.mxu0 0.0
    %143 = vmatpush1.msra.mxu0 0.0
    %144 = vmatprep.subr.mxu0 0.0
    %145 = vmatpush1.msra.mxu0 0.0
    %146 = vmatprep.subr.mxu0 0.0
    %147 = vmatpush1.msra.mxu0 0.0
    %148 = vmatprep.subr.mxu0 0.0
    %149 = vmatpush1.msra.mxu0 0.0
    %150 = vmatprep.mubr.f32.mxu0 0.0
    %151 = vmatmul.mubr.f32.gmra.mrb[0].mxu0 %v62
    %v152 = vpop.f32.mrb[0].mxu0
    %v153 = vadd.f32 %v84, %v152
    %v154 = vpop.f32.mrb[0].mxu0
    %155 = vdwg.mxu0
    %v156 = vld [vmem:[#allocation7] sm:$0xff]
    %v157 = vld [vmem:[#allocation7 + $0x8] sm:$0xff]
    %v158 = vld [vmem:[#allocation7 + $0x10] sm:$0xff]
    %v159 = vld [vmem:[#allocation7 + $0x18] sm:$0xff]
    %v160 = vld [vmem:[#allocation7 + $0x20] sm:$0xff]
    %v161 = vld [vmem:[#allocation7 + $0x28] sm:$0xff]
    %v162 = vld [vmem:[#allocation7 + $0x30] sm:$0xff]
    %v163 = vld [vmem:[#allocation7 + $0x38] sm:$0xff]
    %v164 = vld [vmem:[#allocation7 + $0x40] sm:$0xff]
    %v165 = vld [vmem:[#allocation7 + $0x48] sm:$0xff]
    %v166 = vld [vmem:[#allocation7 + $0x50] sm:$0xff]
    %v167 = vld [vmem:[#allocation7 + $0x58] sm:$0xff]
    %v168 = vld [vmem:[#allocation7 + $0x60] sm:$0xff]
    %v169 = vld [vmem:[#allocation7 + $0x68] sm:$0xff]
    %v170 = vld [vmem:[#allocation7 + $0x70] sm:$0xff]
    %v171 = vld [vmem:[#allocation7 + $0x78] sm:$0xff]
    %172 = vmatprep.subr.mxu0 0.0
    %173 = vmatpush1.msra.mxu0 %v156
    %174 = vmatprep.subr.mxu0 0.0
    %175 = vmatpush1.msra.mxu0 %v157
    %176 = vmatprep.subr.mxu0 0.0
    %177 = vmatpush1.msra.mxu0 %v158
    %178 = vmatprep.subr.mxu0 0.0
    %179 = vmatpush1.msra.mxu0 %v159
    %180 = vmatprep.subr.mxu0 0.0
    %181 = vmatpush1.msra.mxu0 %v160
    %182 = vmatprep.subr.mxu0 0.0
    %183 = vmatpush1.msra.mxu0 %v161
    %184 = vmatprep.subr.mxu0 0.0
    %185 = vmatpush1.msra.mxu0 %v162
    %186 = vmatprep.subr.mxu0 0.0
    %187 = vmatpush1.msra.mxu0 %v163
    %188 = vmatprep.subr.mxu0 0.0
    %189 = vmatpush1.msra.mxu0 %v164
    %190 = vmatprep.subr.mxu0 0.0
    %191 = vmatpush1.msra.mxu0 %v165
    %192 = vmatprep.subr.mxu0 0.0
    %193 = vmatpush1.msra.mxu0 %v166
    %194 = vmatprep.subr.mxu0 0.0
    %195 = vmatpush1.msra.mxu0 %v167
    %196 = vmatprep.subr.mxu0 0.0
    %197 = vmatpush1.msra.mxu0 %v168
    %198 = vmatprep.subr.mxu0 0.0
    %199 = vmatpush1.msra.mxu0 %v169
    %200 = vmatprep.subr.mxu0 0.0
    %201 = vmatpush1.msra.mxu0 %v170
    %202 = vmatprep.subr.mxu0 0.0
    %203 = vmatpush1.msra.mxu0 %v171
    %204 = vmatprep.subr.mxu0 0.0
    %205 = vmatpush1.msra.mxu0 0.0
    %206 = vmatprep.subr.mxu0 0.0
    %207 = vmatpush1.msra.mxu0 0.0
    %208 = vmatprep.subr.mxu0 0.0
    %209 = vmatpush1.msra.mxu0 0.0
    %210 = vmatprep.subr.mxu0 0.0
    %211 = vmatpush1.msra.mxu0 0.0
    %212 = vmatprep.subr.mxu0 0.0
    %213 = vmatpush1.msra.mxu0 0.0
    %214 = vmatprep.subr.mxu0 0.0
    %215 = vmatpush1.msra.mxu0 0.0
    %216 = vmatprep.subr.mxu0 0.0
    %217 = vmatpush1.msra.mxu0 0.0
    %218 = vmatprep.subr.mxu0 0.0
    %219 = vmatpush1.msra.mxu0 0.0
    %220 = vmatprep.subr.mxu0 0.0
    %221 = vmatpush1.msra.mxu0 0.0
    %222 = vmatprep.subr.mxu0 0.0
    %223 = vmatpush1.msra.mxu0 0.0
    %224 = vmatprep.subr.mxu0 0.0
    %225 = vmatpush1.msra.mxu0 0.0
    %226 = vmatprep.subr.mxu0 0.0
    %227 = vmatpush1.msra.mxu0 0.0
    %228 = vmatprep.subr.mxu0 0.0
    %229 = vmatpush1.msra.mxu0 0.0
    %230 = vmatprep.subr.mxu0 0.0
    %231 = vmatpush1.msra.mxu0 0.0
    %232 = vmatprep.subr.mxu0 0.0
    %233 = vmatpush1.msra.mxu0 0.0
    %234 = vmatprep.subr.mxu0 0.0
    %235 = vmatpush1.msra.mxu0 0.0
    %236 = vmatprep.mubr.f32.mxu0 0.0
    %237 = vmatmul.mubr.f32.gmra.mrb[0].mxu0 %v153
    %v238 = vpop.f32.mrb[0].mxu0
    %v239 = vadd.f32 0.0, %v238
    %v240 = vpop.f32.mrb[0].mxu0
    %241 = vdwg.mxu0
    %vm242 = vcmp.gt.f32.partialorder %v239, 0.0
    %v243 = vsel %vm242, 1.0, 0.01
    %v244 = vmul.f32 %v153, %v243
    %v245 = vld [vmem:[#allocation5] sm:$0xff]
    %v246 = vld [vmem:[#allocation5 + $0x8] sm:$0xff]
    %v247 = vld [vmem:[#allocation5 + $0x10] sm:$0xff]
    %v248 = vld [vmem:[#allocation5 + $0x18] sm:$0xff]
    %v249 = vld [vmem:[#allocation5 + $0x20] sm:$0xff]
    %v250 = vld [vmem:[#allocation5 + $0x28] sm:$0xff]
    %v251 = vld [vmem:[#allocation5 + $0x30] sm:$0xff]
    %v252 = vld [vmem:[#allocation5 + $0x38] sm:$0xff]
    %v253 = vld [vmem:[#allocation5 + $0x40] sm:$0xff]
    %v254 = vld [vmem:[#allocation5 + $0x48] sm:$0xff]
    %v255 = vld [vmem:[#allocation5 + $0x50] sm:$0xff]
    %v256 = vld [vmem:[#allocation5 + $0x58] sm:$0xff]
    %v257 = vld [vmem:[#allocation5 + $0x60] sm:$0xff]
    %v258 = vld [vmem:[#allocation5 + $0x68] sm:$0xff]
    %v259 = vld [vmem:[#allocation5 + $0x70] sm:$0xff]
    %v260 = vld [vmem:[#allocation5 + $0x78] sm:$0xff]
    %261 = vmatprep.subr.mxu0 0.0
    %262 = vmatpush1.msra.mxu0 %v245
    %263 = vmatprep.subr.mxu0 0.0
    %264 = vmatpush1.msra.mxu0 %v246
    %265 = vmatprep.subr.mxu0 0.0
    %266 = vmatpush1.msra.mxu0 %v247
    %267 = vmatprep.subr.mxu0 0.0
    %268 = vmatpush1.msra.mxu0 %v248
    %269 = vmatprep.subr.mxu0 0.0
    %270 = vmatpush1.msra.mxu0 %v249
    %271 = vmatprep.subr.mxu0 0.0
    %272 = vmatpush1.msra.mxu0 %v250
    %273 = vmatprep.subr.mxu0 0.0
    %274 = vmatpush1.msra.mxu0 %v251
    %275 = vmatprep.subr.mxu0 0.0
    %276 = vmatpush1.msra.mxu0 %v252
    %277 = vmatprep.subr.mxu0 0.0
    %278 = vmatpush1.msra.mxu0 %v253
    %279 = vmatprep.subr.mxu0 0.0
    %280 = vmatpush1.msra.mxu0 %v254
    %281 = vmatprep.subr.mxu0 0.0
    %282 = vmatpush1.msra.mxu0 %v255
    %283 = vmatprep.subr.mxu0 0.0
    %284 = vmatpush1.msra.mxu0 %v256
    %285 = vmatprep.subr.mxu0 0.0
    %286 = vmatpush1.msra.mxu0 %v257
    %287 = vmatprep.subr.mxu0 0.0
    %288 = vmatpush1.msra.mxu0 %v258
    %289 = vmatprep.subr.mxu0 0.0
    %290 = vmatpush1.msra.mxu0 %v259
    %291 = vmatprep.subr.mxu0 0.0
    %292 = vmatpush1.msra.mxu0 %v260
    %293 = vmatprep.subr.mxu0 0.0
    %294 = vmatpush1.msra.mxu0 0.0
    %295 = vmatprep.subr.mxu0 0.0
    %296 = vmatpush1.msra.mxu0 0.0
    %297 = vmatprep.subr.mxu0 0.0
    %298 = vmatpush1.msra.mxu0 0.0
    %299 = vmatprep.subr.mxu0 0.0
    %300 = vmatpush1.msra.mxu0 0.0
    %301 = vmatprep.subr.mxu0 0.0
    %302 = vmatpush1.msra.mxu0 0.0
    %303 = vmatprep.subr.mxu0 0.0
    %304 = vmatpush1.msra.mxu0 0.0
    %305 = vmatprep.subr.mxu0 0.0
    %306 = vmatpush1.msra.mxu0 0.0
    %307 = vmatprep.subr.mxu0 0.0
    %308 = vmatpush1.msra.mxu0 0.0
    %309 = vmatprep.subr.mxu0 0.0
    %310 = vmatpush1.msra.mxu0 0.0
    %311 = vmatprep.subr.mxu0 0.0
    %312 = vmatpush1.msra.mxu0 0.0
    %313 = vmatprep.subr.mxu0 0.0
    %314 = vmatpush1.msra.mxu0 0.0
    %315 = vmatprep.subr.mxu0 0.0
    %316 = vmatpush1.msra.mxu0 0.0
    %317 = vmatprep.subr.mxu0 0.0
    %318 = vmatpush1.msra.mxu0 0.0
    %319 = vmatprep.subr.mxu0 0.0
    %320 = vmatpush1.msra.mxu0 0.0
    %321 = vmatprep.subr.mxu0 0.0
    %322 = vmatpush1.msra.mxu0 0.0
    %323 = vmatprep.subr.mxu0 0.0
    %324 = vmatpush1.msra.mxu0 0.0
    %325 = vmatprep.mubr.f32.mxu0 0.0
    %326 = vmatmul.mubr.f32.gmra.mrb[0].mxu0 %v244
    %v327 = vpop.f32.mrb[0].mxu0
    %v328 = vadd.f32 %v62, %v327
    %v329 = vpop.f32.mrb[0].mxu0
    %330 = vdwg.mxu0
    %331 = vst [vmem:[#allocation8] sm:$0xff] %v328
    // Predicated region
    $region34: #{tpu_custom_call.1} parent=1 // pred_check
      _
    $region35: #{tpu_custom_call.1} parent=1 // pred_check_branch
      %333 = sbr.rel (0) target = $region37
    $region36: #{tpu_custom_call.1} parent=1 // pred_region
      %s335 = ssub.s32 128, 128
      %336 = vsyncadd [#allocation4], %s335
      %s338 = sshll.u32 [#allocation8], 4
      %s339 = int_to_ptr.vmem [resolvable:$true] %s338
      %341 = dma.vmem_to_hbm [thread:$0]  %s339, 128, %s5, [#allocation4]
    $region37: #{tpu_custom_call.1} parent=1 // pred_fallthru
      _
    // Predicated region
    $region38: #{tpu_custom_call.1} parent=1 // pred_check
      _
    $region39: #{tpu_custom_call.1} parent=1 // pred_check_branch
      %343 = sbr.rel (0) target = $region41
    $region40: #{tpu_custom_call.1} parent=1 // pred_region
      %344 = dma.done [#allocation4], 128
    $region41: #{tpu_custom_call.1} parent=1 // pred_fallthru
      _
    %345 = vsyncpa [#allocation3], 1
    %346 = vsyncpa [#allocation6], 1
    %347 = vsyncpa [#allocation4], 1

</llo_original>
